<compile_context>
chip_gen: v5e
topology: v5e:2x2
jax: 0.10.0
libtpu: 0.0.40
codegen_flags: <defaults>
</compile_context>

<pallas_src>
import math
from functools import partial

import jax
import jax.numpy as jnp
from jax.experimental import pallas as pl
from jax.experimental.pallas import tpu as pltpu


_VMEM_LIMIT = 32 * 1024 * 1024  # safe scoped-VMEM budget on v5e/v6e/v7x


def _pick_tile(dim, candidates):
    """Largest candidate that evenly divides `dim`; else the full dim."""
    for c in candidates:
        if c <= dim and dim % c == 0:
            return c
    return dim


# ---------------------------------------------------------------------------
# Tiled linear kernel:  y = x @ w    (w already transposed to (F_in, F_out))
# ---------------------------------------------------------------------------
def _matmul_kernel(x_ref, w_ref, o_ref, acc_ref):
    @pl.when(pl.program_id(2) == 0)
    def _():
        acc_ref[...] = jnp.zeros(acc_ref.shape, jnp.float32)

    acc_ref[...] += jnp.dot(
        x_ref[...], w_ref[...], preferred_element_type=jnp.float32
    )

    @pl.when(pl.program_id(2) == pl.num_programs(2) - 1)
    def _():
        o_ref[...] = acc_ref[...].astype(o_ref.dtype)


def pallas_linear(x, wt):
    # x: (M, K), wt: (K, N)  ->  y = x @ wt  : (M, N)
    M, K = x.shape
    K2, N = wt.shape
    assert K == K2
    tm = _pick_tile(M, (256, 128, 8))
    tn = _pick_tile(N, (512, 256, 128))
    tk = _pick_tile(K, (512, 256, 128))
    grid = (M // tm, N // tn, K // tk)
    return pl.pallas_call(
        _matmul_kernel,
        out_shape=jax.ShapeDtypeStruct((M, N), x.dtype),
        grid=grid,
        in_specs=[
            pl.BlockSpec((tm, tk), lambda i, j, k: (i, k)),
            pl.BlockSpec((tk, tn), lambda i, j, k: (k, j)),
        ],
        out_specs=pl.BlockSpec((tm, tn), lambda i, j, k: (i, j)),
        scratch_shapes=[pltpu.VMEM((tm, tn), jnp.float32)],
        compiler_params=pltpu.CompilerParams(
            dimension_semantics=("parallel", "parallel", "arbitrary"),
            vmem_limit_bytes=_VMEM_LIMIT,
        ),
        cost_estimate=pl.CostEstimate(
            flops=int(2 * M * N * K),
            transcendentals=0,
            bytes_accessed=int((M * K + K * N + M * N) * x.dtype.itemsize),
        ),
    )(x, wt)


# ---------------------------------------------------------------------------
# Flash-style attention kernel (all heads per step, online softmax over kv)
# ---------------------------------------------------------------------------
def _flash_attn_kernel(q_ref, k_ref, v_ref, o_ref, m_sc, l_sc, acc_sc, *,
                       scale, n_heads):
    kv = pl.program_id(1)

    @pl.when(kv == 0)
    def _():
        m_sc[...] = jnp.full(m_sc.shape, -jnp.inf, jnp.float32)
        l_sc[...] = jnp.zeros(l_sc.shape, jnp.float32)
        acc_sc[...] = jnp.zeros(acc_sc.shape, jnp.float32)

    # Fold the 1/sqrt(d) scale into the (much smaller) q tile rather than the
    # (H, tq, tk) score tile:  H*tq*D muls/step instead of H*tq*tk.
    q = q_ref[...] * jnp.asarray(scale, dtype=q_ref.dtype)

    # (H, tq, D) x (H, tk, D) -> (H, tq, tk); native-dtype MXU inputs,
    # f32 accumulation via preferred_element_type.
    s = jnp.einsum(
        "hqd,hkd->hqk", q, k_ref[...],
        preferred_element_type=jnp.float32,
    )

    m_prev = m_sc[...]
    m_new = jnp.maximum(m_prev, jnp.max(s, axis=-1, keepdims=True))
    alpha = jnp.exp(m_prev - m_new)
    p = jnp.exp(s - m_new)
    l_sc[...] = alpha * l_sc[...] + jnp.sum(p, axis=-1, keepdims=True)
    acc_sc[...] = alpha * acc_sc[...] + jnp.einsum(
        "hqk,hkd->hqd", p.astype(v_ref.dtype), v_ref[...],
        preferred_element_type=jnp.float32,
    )
    m_sc[...] = m_new

    @pl.when(kv == pl.num_programs(1) - 1)
    def _():
        inv_l = pl.reciprocal(l_sc[...], approx=True)   # EUP, off the VALU path
        o = acc_sc[...] * inv_l                          # (H, tq, D) f32
        # Single lane-dense (tq, H*D) store: heads concatenated along lanes.
        o_ref[...] = jnp.concatenate(
            [o[h].astype(o_ref.dtype) for h in range(n_heads)], axis=-1
        )


def pallas_mha(q, k, v, head_dim):
    # q, k, v: (H, N, D)  ->  out: (N, H*D)  (lane-dense, h-major / d-minor)
    H, N, D = q.shape
    scale = 1.0 / math.sqrt(head_dim)
    tq = _pick_tile(N, (256, 128))
    tk = _pick_tile(N, (512, 256, 128))
    grid = (N // tq, N // tk)

    q_spec = pl.BlockSpec((H, tq, D), lambda qi, ki: (0, qi, 0))
    kv_spec = pl.BlockSpec((H, tk, D), lambda qi, ki: (0, ki, 0))
    o_spec = pl.BlockSpec((tq, H * D), lambda qi, ki: (qi, 0))

    return pl.pallas_call(
        partial(_flash_attn_kernel, scale=scale, n_heads=H),
        out_shape=jax.ShapeDtypeStruct((N, H * D), q.dtype),
        grid=grid,
        in_specs=[q_spec, kv_spec, kv_spec],
        out_specs=o_spec,
        scratch_shapes=[
            pltpu.VMEM((H, tq, 1), jnp.float32),   # running max m
            pltpu.VMEM((H, tq, 1), jnp.float32),   # running denom l
            pltpu.VMEM((H, tq, D), jnp.float32),   # running output acc
        ],
        compiler_params=pltpu.CompilerParams(
            dimension_semantics=("parallel", "arbitrary"),
            vmem_limit_bytes=_VMEM_LIMIT,
        ),
        cost_estimate=pl.CostEstimate(
            flops=int(4 * H * N * N * D),
            transcendentals=int(H * N * N),
            bytes_accessed=int(4 * H * N * D * q.dtype.itemsize),
        ),
    )(q, k, v)


# ---------------------------------------------------------------------------
# Full forward (glue in plain JAX, hot paths in Pallas)
# ---------------------------------------------------------------------------
def _reorder_qkv_rows(n_heads, head_dim):
    # new output layout [Q | K | V] (each h-major, d-minor) -> original
    # '(h d qkv)' row indices of w_qkv.
    HD = n_heads * head_dim
    new_idx = jnp.arange(3 * HD)
    qkv_sel = new_idx // HD
    rem = new_idx % HD
    h_sel = rem // head_dim
    d_sel = rem % head_dim
    return h_sel * (head_dim * 3) + d_sel * 3 + qkv_sel


def attention_forward(x, w_qkv, w_out, n_heads, head_dim):
    # x: (1, N, F)  -- module squeezes batch dim 0, so batch must be 1.
    B, N, F = x.shape
    assert B == 1, "module squeezes batch dim 0 -> batch must be 1"
    HD = n_heads * head_dim
    x2 = x.reshape(N, F)

    # One-time parameter prep (plain XLA, outside the kernels):
    #  * permute w_qkv rows so the projection output is contiguous [Q | K | V];
    #  * pre-transpose weights so the kernels contract with no in-kernel .T.
    perm = _reorder_qkv_rows(n_heads, head_dim)
    wt_qkv = w_qkv[perm].T            # (F, 3*H*D)
    wt_out = w_out.T                  # (H*D, F)

    qkv = pallas_linear(x2, wt_qkv)   # (N, 3*H*D) = [Q | K | V]

    # Contiguous slices, then head-major layout for the attention kernel.
    # TODO(synk): the (N,H,D)->(H,N,D) transposes are still XLA relayouts;
    # consuming the (N, H*D) slab directly would cost lane density at small D.
    def heads(a):
        return jnp.transpose(a.reshape(N, n_heads, head_dim), (1, 0, 2))

    q = heads(qkv[:, 0 * HD:1 * HD])
    k = heads(qkv[:, 1 * HD:2 * HD])
    v = heads(qkv[:, 2 * HD:3 * HD])

    o = pallas_mha(q, k, v, head_dim)   # (N, H*D), ready for the out proj
    out = pallas_linear(o, wt_out)      # (N, F)
    return out.reshape(1, N, F)


# ---------------------------------------------------------------------------
# Pure-JAX reference (uses the ORIGINAL weight layout -> also checks the perm)
# ---------------------------------------------------------------------------
def reference_forward(x, w_qkv, w_out, n_heads, head_dim):
    B, N, F = x.shape
    qkv = x.reshape(N, F) @ w_qkv.T
    qkv = qkv.reshape(N, n_heads, head_dim, 3)
    q = jnp.transpose(qkv[..., 0], (1, 0, 2)).astype(jnp.float32)
    k = jnp.transpose(qkv[..., 1], (1, 0, 2)).astype(jnp.float32)
    v = jnp.transpose(qkv[..., 2], (1, 0, 2)).astype(jnp.float32)
    s = jnp.einsum("hid,hjd->hij", q, k) / math.sqrt(head_dim)
    p = jax.nn.softmax(s, axis=-1)
    o = jnp.einsum("hij,hjd->hid", p, v)
    o = jnp.transpose(o, (1, 0, 2)).reshape(N, n_heads * head_dim).astype(x.dtype)
    return (o @ w_out.T).reshape(1, N, F)


# ---------------------------------------------------------------------------
def _run_case(key, n_feats, head_dim, n_heads, seq):
    kx, kq, ko = jax.random.split(key, 3)
    x = jax.random.normal(kx, (1, seq, n_feats), dtype=jnp.float32)

    bound_qkv = 1.0 / math.sqrt(n_feats)
    w_qkv = jax.random.uniform(
        kq, (3 * n_heads * head_dim, n_feats), jnp.float32, -bound_qkv, bound_qkv
    )
    bound_out = 1.0 / math.sqrt(n_heads * head_dim)
    w_out = jax.random.uniform(
        ko, (n_feats, n_heads * head_dim), jnp.float32, -bound_out, bound_out
    )

    out = attention_forward(x, w_qkv, w_out, n_heads, head_dim)
    out = jax.block_until_ready(out)

    ref = reference_forward(x, w_qkv, w_out, n_heads, head_dim)
    assert out.shape == (1, seq, n_feats)
    assert jnp.allclose(out, ref, atol=2e-3, rtol=2e-3), (
        f"mismatch vs reference (n_feats={n_feats}, seq={seq})"
    )


if __name__ == "__main__":
    key = jax.random.PRNGKey(0)
    k_small, k_big = jax.random.split(key)

    # Small shapes consistent with the module (single-tile path).
    _run_case(k_small, n_feats=32, head_dim=8, n_heads=4, seq=8)

    # Moderate shapes that exercise the tiled matmul grid and the
    # multi-kv-step online-softmax path (tq=256, tk=512).
    _run_case(k_big, n_feats=256, head_dim=64, n_heads=8, seq=1024)

    print("KERNEL_OK")
</pallas_src>

<mosaic_0001>
module attributes {stable_mosaic.version = 11 : i64} {
  func.func @_matmul_kernel(%arg0: i32, %arg1: i32, %arg2: i32, %arg3: memref<8x32xf32, #tpu.memory_space<vmem>>, %arg4: memref<32x96xf32, #tpu.memory_space<vmem>>, %arg5: memref<8x96xf32, #tpu.memory_space<vmem>>, %arg6: memref<8x96xf32, #tpu.memory_space<vmem>>) attributes {dimension_semantics = [#tpu.dimension_semantics<parallel>, #tpu.dimension_semantics<parallel>, #tpu.dimension_semantics<arbitrary>], iteration_bounds = array<i64: 1, 1, 1>, scalar_prefetch = 0 : i64, scratch_operands = 1 : i64, tpu.core_type = #tpu.core_type<tc>, window_params = [{transform_indices = @transform_0, window_bounds = array<i64: 8, 32>}, {transform_indices = @transform_1, window_bounds = array<i64: 32, 96>}, {transform_indices = @transform_2, window_bounds = array<i64: 8, 96>}]} {
    %c0_i32 = arith.constant 0 : i32
    %0 = arith.cmpi eq, %arg2, %c0_i32 : i32
    %1 = arith.extui %0 : i1 to i32
    %c0_i32_0 = arith.constant 0 : i32
    %2 = arith.cmpi ne, %1, %c0_i32_0 : i32
    scf.if %2 {
      %cst_10 = arith.constant 0.000000e+00 : f32
      %12 = vector.broadcast %cst_10 : f32 to vector<8x96xf32>
      %c0_11 = arith.constant 0 : index
      %c0_12 = arith.constant 0 : index
      %13 = vector.load %arg6[%c0_11, %c0_12] : memref<8x96xf32, #tpu.memory_space<vmem>>, vector<8x96xf32>
      tpu.vector_store %arg6[%c0_11, %c0_12], %12 {strides = array<i32>} : memref<8x96xf32, #tpu.memory_space<vmem>>, vector<8x96xf32>,
    } else {
    }
    %c0 = arith.constant 0 : index
    %c0_1 = arith.constant 0 : index
    %3 = vector.load %arg6[%c0, %c0_1] : memref<8x96xf32, #tpu.memory_space<vmem>>, vector<8x96xf32>
    %c0_2 = arith.constant 0 : index
    %c0_3 = arith.constant 0 : index
    %4 = vector.load %arg3[%c0_2, %c0_3] : memref<8x32xf32, #tpu.memory_space<vmem>>, vector<8x32xf32>
    %c0_4 = arith.constant 0 : index
    %c0_5 = arith.constant 0 : index
    %5 = vector.load %arg4[%c0_4, %c0_5] : memref<32x96xf32, #tpu.memory_space<vmem>>, vector<32x96xf32>
    %cst = arith.constant dense<0.000000e+00> : vector<8x96xf32>
    %6 = tpu.matmul %4, %5, %cst {dimension_numbers = #tpu.dot_dimension_numbers<[1], [0], [0], [1], [0, 0, 1, 1], [], []>} : vector<8x32xf32>, vector<32x96xf32>, vector<8x96xf32> -> vector<8x96xf32>
    %7 = arith.addf %3, %6 : vector<8x96xf32>
    %c0_6 = arith.constant 0 : index
    %c0_7 = arith.constant 0 : index
    %8 = vector.load %arg6[%c0_6, %c0_7] : memref<8x96xf32, #tpu.memory_space<vmem>>, vector<8x96xf32>
    tpu.vector_store %arg6[%c0_6, %c0_7], %7 {strides = array<i32>} : memref<8x96xf32, #tpu.memory_space<vmem>>, vector<8x96xf32>,
    %c0_i32_8 = arith.constant 0 : i32
    %9 = arith.cmpi eq, %arg2, %c0_i32_8 : i32
    %10 = arith.extui %9 : i1 to i32
    %c0_i32_9 = arith.constant 0 : i32
    %11 = arith.cmpi ne, %10, %c0_i32_9 : i32
    scf.if %11 {
      %c0_10 = arith.constant 0 : index
      %c0_11 = arith.constant 0 : index
      %12 = vector.load %arg6[%c0_10, %c0_11] : memref<8x96xf32, #tpu.memory_space<vmem>>, vector<8x96xf32>
      %c0_12 = arith.constant 0 : index
      %c0_13 = arith.constant 0 : index
      %13 = vector.load %arg5[%c0_12, %c0_13] : memref<8x96xf32, #tpu.memory_space<vmem>>, vector<8x96xf32>
      tpu.vector_store %arg5[%c0_12, %c0_13], %12 {strides = array<i32>} : memref<8x96xf32, #tpu.memory_space<vmem>>, vector<8x96xf32>,
    } else {
    }
    return
  }
  func.func @transform_0(%arg0: i32, %arg1: i32, %arg2: i32) -> (i32, i32) {
    %c0_i32 = arith.constant 0 : i32
    return %arg0, %arg2 : i32, i32
  }
  func.func @transform_1(%arg0: i32, %arg1: i32, %arg2: i32) -> (i32, i32) {
    %c0_i32 = arith.constant 0 : i32
    return %arg2, %arg1 : i32, i32
  }
  func.func @transform_2(%arg0: i32, %arg1: i32, %arg2: i32) -> (i32, i32) {
    %c0_i32 = arith.constant 0 : i32
    return %arg0, %arg1 : i32, i32
  }
}

</mosaic_0001>

<llo_original>
// kernel: tpu_custom_call.1
$region0: #{tpu_custom_call.1}
  #allocation0 [shape = 'u32[]', space=smem, size = 0x4, offset = 0x4, fixed_abs, tag = 'smem constant byte address 0x4 - core index']
  #allocation1 [shape = 'u32[72,128]{1,0:T(1,128)}', space=vmem, size = 0x9000, scoped, tag = 'internal scratch']
  #allocation2 [shape = 'f32[8,96]{1,0:T(8,128)}', space=vmem, size = 0x1000, scoped, tag = 'scratch operand']
  %s0 = inlined_call_operand.hbm [shape: f32[8,32], index: 0, kind: input, shape index: {}]
  %s1 = inlined_call_operand.hbm [shape: f32[32,96], index: 1, kind: input, shape index: {}]
  %s2 = inlined_call_operand.hbm [shape: f32[8,96], index: 2, kind: output, shape index: {}]
  %s3 = sld [smem:[#allocation0]]
  $region34: #{tpu_custom_call.1} parent=0
    _
  %s5 = ssub.s32 1, %s3
  %s6 = scalar_select 0, %s5, %s3
  $region1: #{tpu_custom_call.1} parent=0
    #allocation3 [shape = 'u8[4096]{0}', space=vmem, size = 0x1000, scoped, tag = 'input window, operand 0, single buffered']
    #allocation4 [shape = 's32[1]{0}', space=sflag, size = 0x4, scoped, tag = 'scoped memory for tpu_custom_call.1']
    #allocation5 [shape = 's32[1]{0}', space=sflag, size = 0x4, scoped, tag = 'scoped memory for tpu_custom_call.1']
    #allocation6 [shape = 'u8[16384]{0}', space=vmem, size = 0x4000, scoped, tag = 'input window, operand 1, single buffered']
    #allocation7 [shape = 's32[1]{0}', space=sflag, size = 0x4, scoped, tag = 'scoped memory for tpu_custom_call.1']
    #allocation8 [shape = 'u8[4096]{0}', space=vmem, size = 0x1000, scoped, tag = 'output window, operand 0, single buffered']
    %7 = vsyncpa [#allocation4], 0
    %8 = vsyncpa [#allocation7], 0
    %9 = vsyncpa [#allocation5], 0
    // Predicated region
    $region2: #{tpu_custom_call.1} parent=1 // pred_check
      _
    $region3: #{tpu_custom_call.1} parent=1 // pred_check_branch
      %11 = sbr.rel (0) target = $region5
    $region4: #{tpu_custom_call.1} parent=1 // pred_region
      %13 = vsyncadd [#allocation4], 0
      %s15 = sshll.u32 %s0, 4
      %s16 = int_to_ptr.hbm [resolvable:$true] %s15
      %s17 = sshll.u32 [#allocation3], 4
      %s18 = int_to_ptr.vmem [resolvable:$true] %s17
      %20 = dma.hbm_to_vmem [thread:$0]  %s16, 128, %s18, [#allocation4]
    $region5: #{tpu_custom_call.1} parent=1 // pred_fallthru
      _
    // Predicated region
    $region6: #{tpu_custom_call.1} parent=1 // pred_check
      _
    $region7: #{tpu_custom_call.1} parent=1 // pred_check_branch
      %22 = sbr.rel (0) target = $region9
    $region8: #{tpu_custom_call.1} parent=1 // pred_region
      %24 = vsyncadd [#allocation7], 0
      %s25 = sshll.u32 %s1, 4
      %s26 = int_to_ptr.hbm [resolvable:$true] %s25
      %s27 = sshll.u32 [#allocation6], 4
      %s28 = int_to_ptr.vmem [resolvable:$true] %s27
      %33 = dma.hbm_to_vmem [thread:$0]  %s26, 512, %s28, [#allocation7], 128, 128, 8
    $region9: #{tpu_custom_call.1} parent=1 // pred_fallthru
      _
    // Predicated region
    $region10: #{tpu_custom_call.1} parent=1 // pred_check
      _
    $region11: #{tpu_custom_call.1} parent=1 // pred_check_branch
      %35 = sbr.rel (0) target = $region13
    $region12: #{tpu_custom_call.1} parent=1 // pred_region
      %37 = dma.done [#allocation4], 128
    $region13: #{tpu_custom_call.1} parent=1 // pred_fallthru
      _
    // Predicated region
    $region14: #{tpu_custom_call.1} parent=1 // pred_check
      _
    $region15: #{tpu_custom_call.1} parent=1 // pred_check_branch
      %39 = sbr.rel (0) target = $region17
    $region16: #{tpu_custom_call.1} parent=1 // pred_region
      %41 = dma.done [#allocation7], 512
    $region17: #{tpu_custom_call.1} parent=1 // pred_fallthru
      _
    %p42 = scmp.eq.s32.totalorder 0, 0
    // Predicated region
    $region18: #{tpu_custom_call.1} parent=1 // pred_check
      %p43 = pneg %p42
    $region19: #{tpu_custom_call.1} parent=1 // pred_check_branch
      %45 = sbr.rel (%p43) target = $region21
    $region20: #{tpu_custom_call.1} parent=1 // pred_region
      %vm46 = vcmask 785408
      %47 = vst.msk [vmem:[#allocation2] sm:$0xff] %vm46, 0.0
    $region21: #{tpu_custom_call.1} parent=1 // pred_fallthru
      _
    %v48 = vld [vmem:[#allocation2] sm:$0xff]
    %v49 = vld [vmem:[#allocation3] sm:$0xff]
    %v50 = vld [vmem:[#allocation6] sm:$0xff]
    %v51 = vld [vmem:[#allocation6 + $0x8] sm:$0xff]
    %v52 = vld [vmem:[#allocation6 + $0x10] sm:$0xff]
    %v53 = vld [vmem:[#allocation6 + $0x18] sm:$0xff]
    %vm54 = vcmask 261120
    %v56 = vsel %vm54, %v49, 0
    %58 = vmatpush.msra.mxu0 0.0
    %59 = vmatpush.msra.mxu0 0.0
    %60 = vmatpush.msra.mxu0 0.0
    %61 = vmatpush.msra.mxu0 0.0
    %62 = vmatpush.msra.mxu0 0.0
    %63 = vmatpush.msra.mxu0 0.0
    %64 = vmatpush.msra.mxu0 0.0
    %65 = vmatpush.msra.mxu0 0.0
    %66 = vmatpush.msra.mxu0 0.0
    %67 = vmatpush.msra.mxu0 0.0
    %68 = vmatpush.msra.mxu0 0.0
    %69 = vmatpush.msra.mxu0 0.0
    %70 = vmatpush.msra.mxu0 %v53
    %71 = vmatpush.msra.mxu0 %v52
    %72 = vmatpush.msra.mxu0 %v51
    %73 = vmatpush.msra.mxu0 %v50
    %74 = vmatmul.f32.gmra.mxu0 %v56
    %v75 = vpop.f32.mrf.mxu0
    %v76 = vadd.f32 0.0, %v75
    %77 = vdwg.mxu0
    %v78 = vadd.f32 %v48, %v76
    %vm79 = vcmask 785408
    %80 = vst.msk [vmem:[#allocation2] sm:$0xff] %vm79, %v78
    // Predicated region
    $region22: #{tpu_custom_call.1} parent=1 // pred_check
      %p81 = pneg %p42
    $region23: #{tpu_custom_call.1} parent=1 // pred_check_branch
      %83 = sbr.rel (%p81) target = $region25
    $region24: #{tpu_custom_call.1} parent=1 // pred_region
      %v84 = vld [vmem:[#allocation2] sm:$0xff]
      %85 = vst.msk [vmem:[#allocation8] sm:$0xff] %vm79, %v84
    $region25: #{tpu_custom_call.1} parent=1 // pred_fallthru
      _
    // Predicated region
    $region26: #{tpu_custom_call.1} parent=1 // pred_check
      _
    $region27: #{tpu_custom_call.1} parent=1 // pred_check_branch
      %87 = sbr.rel (0) target = $region29
    $region28: #{tpu_custom_call.1} parent=1 // pred_region
      %89 = vsyncadd [#allocation5], 0
      %s91 = sshll.u32 [#allocation8], 4
      %s92 = int_to_ptr.vmem [resolvable:$true] %s91
      %s93 = sshll.u32 %s2, 4
      %s94 = int_to_ptr.hbm [resolvable:$true] %s93
      %96 = dma.vmem_to_hbm [thread:$0]  %s92, 128, %s94, [#allocation5]
    $region29: #{tpu_custom_call.1} parent=1 // pred_fallthru
      _
    // Predicated region
    $region30: #{tpu_custom_call.1} parent=1 // pred_check
      _
    $region31: #{tpu_custom_call.1} parent=1 // pred_check_branch
      %98 = sbr.rel (0) target = $region33
    $region32: #{tpu_custom_call.1} parent=1 // pred_region
      %100 = dma.done [#allocation5], 128
    $region33: #{tpu_custom_call.1} parent=1 // pred_fallthru
      _
    %101 = vsyncpa [#allocation4], 1
    %102 = vsyncpa [#allocation7], 1
    %103 = vsyncpa [#allocation5], 1

</llo_original>
